<compile_context>
chip_gen: v7x
topology: tpu7x:2x2x1
jax: 0.10.0
libtpu: 0.0.40
codegen_flags: <defaults>
</compile_context>

<pallas_src>
import functools

import jax
import jax.numpy as jnp
import numpy as np
from jax.experimental import pallas as pl
from jax.experimental.pallas import tpu as pltpu


def channel_attention_kernel(x_ref, wqkv_ref, wproj_ref, bproj_ref, temp_ref,
                             bias_ref, out_ref):
    """One grid step == one batch element.  Everything VMEM-resident (<2 MiB)."""
    N, C = x_ref.shape                       # (N, C) per-batch block
    x = x_ref[...].astype(jnp.bfloat16)      # bf16 MXU inputs, f32 accumulation

    # ---- Fused qkv projection: ONE 384-wide MXU pass.
    qkv = jnp.dot(x, wqkv_ref[...], preferred_element_type=jnp.float32)   # (N, 3C)
    q = qkv[:, :C]                           # 128-lane-aligned slices -> free
    k = qkv[:, C:2 * C]
    v = qkv[:, 2 * C:]

    # ---- Per-channel L2 normalization over the token axis (== F.normalize(dim=-1)
    # on the (B,H,D,N)-transposed q/k).  Sum-of-squares and rsqrt stay in f32 (EUP).
    eps2 = jnp.float32(1e-24)                # (F.normalize eps = 1e-12) ** 2
    qn = q * jax.lax.rsqrt(jnp.maximum(jnp.sum(q * q, axis=0, keepdims=True), eps2))
    kn = k * jax.lax.rsqrt(jnp.maximum(jnp.sum(k * k, axis=0, keepdims=True), eps2))
    kn = kn * temp_ref[...]                  # fold per-head temperature into k columns

    # ---- Transposed gram for ALL heads at once:
    #   attn_t[j, i] = sum_n kn[n, j] * qn[n, i]   (== attn[i, j] of the reference)
    # Computing it transposed lets the attn@v step contract attn_t's LEADING dim as a
    # plain matmul -- no XLU transpose.
    attn_t = jax.lax.dot_general(kn.astype(jnp.bfloat16), qn.astype(jnp.bfloat16),
                                 (((0,), (0,)), ((), ())),
                                 preferred_element_type=jnp.float32)      # (C, C)

    # ---- Block-diagonal head bias (precomputed 0 / -1e30, symmetric) + softmax.
    # Softmax over the reference's last axis == axis 0 of the transposed gram.
    attn_t = attn_t + bias_ref[...]
    attn_t = attn_t - jnp.max(attn_t, axis=0, keepdims=True)
    p = jnp.exp(attn_t)
    p = p / jnp.sum(p, axis=0, keepdims=True)    # EXACT divide (approx reciprocal was
                                                 # the source of the tolerance miss)

    # ---- out[n, i] = sum_j attn[i, j] * v[n, j] == (v @ attn_t)[n, i]
    y = jnp.dot(v.astype(jnp.bfloat16), p.astype(jnp.bfloat16),
                preferred_element_type=jnp.float32)                       # (N, C)

    # ---- Output projection + bias; lane-dense 128-wide store.
    out = jnp.dot(y.astype(jnp.bfloat16), wproj_ref[...],
                  preferred_element_type=jnp.float32) + bproj_ref[...]
    out_ref[...] = out.astype(out_ref.dtype)


@functools.partial(jax.jit, static_argnames=("num_heads",))
def channel_attention(x, wqkv, wproj, bproj, temperature, *, num_heads=8):
    B, N, C = x.shape
    assert C % num_heads == 0
    D = C // num_heads

    # Wrapper-side (free in XLA) layout plumbing.
    x2d = x.reshape(B * N, C)                                    # (B*N, C) slab
    wqkv_bf = wqkv.astype(jnp.bfloat16)                          # halve weight HBM bytes
    wproj_bf = wproj.astype(jnp.bfloat16)
    bproj2d = bproj.reshape(1, C).astype(jnp.float32)
    temp_row = jnp.repeat(temperature.reshape(-1).astype(jnp.float32),
                          D).reshape(1, C)                       # temperature[j // D]
    head = jnp.arange(C, dtype=jnp.int32) // D                   # block-diagonal head
    bias = jnp.where(head[:, None] == head[None, :],             # mask as additive
                     jnp.float32(0.0), jnp.float32(-1e30))       # 0 / -1e30 bias (C, C)

    out2d = pl.pallas_call(
        channel_attention_kernel,
        out_shape=jax.ShapeDtypeStruct((B * N, C), x.dtype),
        grid_spec=pltpu.PrefetchScalarGridSpec(
            num_scalar_prefetch=0,
            grid=(B,),                                           # one step per batch
            in_specs=[
                pl.BlockSpec((N, C), lambda b: (b, 0)),          # per-batch x block
                pl.BlockSpec((C, 3 * C), lambda b: (0, 0)),      # constant block index
                pl.BlockSpec((C, C), lambda b: (0, 0)),          #   -> weights stay
                pl.BlockSpec((1, C), lambda b: (0, 0)),          #      VMEM-resident,
                pl.BlockSpec((1, C), lambda b: (0, 0)),          #      DMA'd once
                pl.BlockSpec((C, C), lambda b: (0, 0)),
            ],
            out_specs=pl.BlockSpec((N, C), lambda b: (b, 0)),
        ),
        compiler_params=pltpu.CompilerParams(
            dimension_semantics=("parallel",),       # shard batch across TCs (v7x)
            vmem_limit_bytes=16 * 1024 * 1024,       # per-step working set < 2 MiB;
        ),                                           # 16 MiB is safe on every gen
    )(x2d, wqkv_bf, wproj_bf, bproj2d, temp_row, bias)
    return out2d.reshape(B, N, C)


def channel_attention_ref(x, wqkv, wproj, bproj, temperature, num_heads):
    """Plain-JAX f32 mirror of the PyTorch ChannelAttention.forward, for checking."""
    B, N, C = x.shape
    D = C // num_heads
    qkv = x @ wqkv                                               # (B, N, 3C)
    qkv = qkv.reshape(B, N, 3, num_heads, D).transpose(2, 0, 3, 1, 4)
    q, k, v = qkv[0], qkv[1], qkv[2]                             # (B, H, N, D)
    q = jnp.swapaxes(q, -2, -1)                                  # (B, H, D, N)
    k = jnp.swapaxes(k, -2, -1)
    v = jnp.swapaxes(v, -2, -1)
    q = q / jnp.maximum(jnp.linalg.norm(q, axis=-1, keepdims=True), 1e-12)
    k = k / jnp.maximum(jnp.linalg.norm(k, axis=-1, keepdims=True), 1e-12)
    attn = (q @ jnp.swapaxes(k, -2, -1)) * temperature[None, :, None, None]
    attn = jax.nn.softmax(attn, axis=-1)
    out = attn @ v                                               # (B, H, D, N)
    out = out.transpose(0, 3, 1, 2).reshape(B, N, C)
    return out @ wproj + bproj[None, None, :]


if __name__ == "__main__":
    # dim=128, num_heads=8 -> head_dim=16; N = 8x8 spatial tokens; B = 2.
    # C = 128 keeps every kernel load/store lane-dense (full 128-lane vregs).
    B, N, C, H = 2, 64, 128, 8

    key = jax.random.PRNGKey(0)
    k1, k2, k3, k4 = jax.random.split(key, 4)
    x = jax.random.normal(k1, (B, N, C), jnp.float32)
    # qkv: Linear(dim, 3*dim, bias=False) -> weight stored as (C, 3C) = W_pt.T
    wqkv = 0.1 * jax.random.normal(k2, (C, 3 * C), jnp.float32)
    # proj: Linear(dim, dim) with bias
    wproj = 0.1 * jax.random.normal(k3, (C, C), jnp.float32)
    bproj = 0.1 * jax.random.normal(k4, (C,), jnp.float32)
    # temperature parameter, shape (num_heads, 1, 1) in PyTorch -> flat (H,)
    temperature = 1.0 + 0.1 * jnp.arange(H, dtype=jnp.float32)

    out = channel_attention(x, wqkv, wproj, bproj, temperature, num_heads=H)
    out = jax.block_until_ready(out)

    ref = channel_attention_ref(x, wqkv, wproj, bproj, temperature, H)
    # Tolerance reflects bf16 MXU inputs (per the perf review); accumulation, the
    # L2 normalization and the softmax max/sum/divide are all exact f32, so the
    # observed error is a few 1e-3 -- 2e-2 leaves several-sigma headroom.
    np.testing.assert_allclose(np.asarray(out), np.asarray(ref),
                               rtol=2e-2, atol=2e-2)
    print("KERNEL_OK")
</pallas_src>

<mosaic_0001>
module attributes {stable_mosaic.version = 11 : i64} {
  func.func @channel_attention_kernel(%arg0: i32, %arg1: memref<64x128xf32, #tpu.memory_space<vmem>>, %arg2: memref<128x384xbf16, #tpu.memory_space<vmem>>, %arg3: memref<128x128xbf16, #tpu.memory_space<vmem>>, %arg4: memref<1x128xf32, #tpu.memory_space<vmem>>, %arg5: memref<1x128xf32, #tpu.memory_space<vmem>>, %arg6: memref<128x128xf32, #tpu.memory_space<vmem>>, %arg7: memref<64x128xf32, #tpu.memory_space<vmem>>) attributes {dimension_semantics = [#tpu.dimension_semantics<parallel>], iteration_bounds = array<i64: 2>, scalar_prefetch = 0 : i64, scratch_operands = 0 : i64, tpu.core_type = #tpu.core_type<tc>, window_params = [{transform_indices = @transform_0, window_bounds = array<i64: 64, 128>}, {pipeline_mode = #tpu.pipeline_mode<synchronous>, transform_indices = @transform_1, window_bounds = array<i64: 128, 384>}, {pipeline_mode = #tpu.pipeline_mode<synchronous>, transform_indices = @transform_2, window_bounds = array<i64: 128, 128>}, {pipeline_mode = #tpu.pipeline_mode<synchronous>, transform_indices = @transform_3, window_bounds = array<i64: 1, 128>}, {pipeline_mode = #tpu.pipeline_mode<synchronous>, transform_indices = @transform_4, window_bounds = array<i64: 1, 128>}, {pipeline_mode = #tpu.pipeline_mode<synchronous>, transform_indices = @transform_5, window_bounds = array<i64: 128, 128>}, {transform_indices = @transform_6, window_bounds = array<i64: 64, 128>}]} {
    %c0 = arith.constant 0 : index
    %c0_0 = arith.constant 0 : index
    %0 = vector.load %arg1[%c0, %c0_0] : memref<64x128xf32, #tpu.memory_space<vmem>>, vector<64x128xf32>
    %1 = arith.truncf %0 : vector<64x128xf32> to vector<64x128xbf16>
    %c0_1 = arith.constant 0 : index
    %c0_2 = arith.constant 0 : index
    %2 = vector.load %arg2[%c0_1, %c0_2] : memref<128x384xbf16, #tpu.memory_space<vmem>>, vector<128x384xbf16>
    %cst = arith.constant dense<0.000000e+00> : vector<64x384xf32>
    %3 = tpu.matmul %1, %2, %cst {dimension_numbers = #tpu.dot_dimension_numbers<[1], [0], [0], [1], [0, 0, 1, 1], [], []>} : vector<64x128xbf16>, vector<128x384xbf16>, vector<64x384xf32> -> vector<64x384xf32>
    %4 = vector.extract_strided_slice %3 {offsets = [0, 0], sizes = [64, 128], strides = [1, 1]} : vector<64x384xf32> to vector<64x128xf32>
    %5 = vector.extract_strided_slice %3 {offsets = [0, 128], sizes = [64, 128], strides = [1, 1]} : vector<64x384xf32> to vector<64x128xf32>
    %6 = vector.extract_strided_slice %3 {offsets = [0, 256], sizes = [64, 128], strides = [1, 1]} : vector<64x384xf32> to vector<64x128xf32>
    %7 = arith.mulf %4, %4 : vector<64x128xf32>
    %cst_3 = arith.constant dense<0.000000e+00> : vector<128xf32>
    %8 = vector.multi_reduction <add>, %7, %cst_3 [0] : vector<64x128xf32> to vector<128xf32>
    %9 = vector.shape_cast %8 : vector<128xf32> to vector<1x128xf32>
    %cst_4 = arith.constant 1.000000e-24 : f32
    %10 = vector.broadcast %cst_4 : f32 to vector<1x128xf32>
    %11 = arith.maximumf %9, %10 : vector<1x128xf32>
    %12 = math.rsqrt %11 : vector<1x128xf32>
    %13 = vector.broadcast %12 : vector<1x128xf32> to vector<64x128xf32>
    %14 = arith.mulf %4, %13 : vector<64x128xf32>
    %15 = arith.mulf %5, %5 : vector<64x128xf32>
    %cst_5 = arith.constant dense<0.000000e+00> : vector<128xf32>
    %16 = vector.multi_reduction <add>, %15, %cst_5 [0] : vector<64x128xf32> to vector<128xf32>
    %17 = vector.shape_cast %16 : vector<128xf32> to vector<1x128xf32>
    %cst_6 = arith.constant 1.000000e-24 : f32
    %18 = vector.broadcast %cst_6 : f32 to vector<1x128xf32>
    %19 = arith.maximumf %17, %18 : vector<1x128xf32>
    %20 = math.rsqrt %19 : vector<1x128xf32>
    %21 = vector.broadcast %20 : vector<1x128xf32> to vector<64x128xf32>
    %22 = arith.mulf %5, %21 : vector<64x128xf32>
    %c0_7 = arith.constant 0 : index
    %c0_8 = arith.constant 0 : index
    %23 = vector.load %arg5[%c0_7, %c0_8] : memref<1x128xf32, #tpu.memory_space<vmem>>, vector<1x128xf32>
    %24 = vector.broadcast %23 : vector<1x128xf32> to vector<64x128xf32>
    %25 = arith.mulf %22, %24 : vector<64x128xf32>
    %26 = arith.truncf %25 : vector<64x128xf32> to vector<64x128xbf16>
    %27 = arith.truncf %14 : vector<64x128xf32> to vector<64x128xbf16>
    %cst_9 = arith.constant dense<0.000000e+00> : vector<128x128xf32>
    %28 = tpu.matmul %26, %27, %cst_9 {dimension_numbers = #tpu.dot_dimension_numbers<[0], [0], [1], [1], [0, 1, 1, 1], [], []>} : vector<64x128xbf16>, vector<64x128xbf16>, vector<128x128xf32> -> vector<128x128xf32>
    %c0_10 = arith.constant 0 : index
    %c0_11 = arith.constant 0 : index
    %29 = vector.load %arg6[%c0_10, %c0_11] : memref<128x128xf32, #tpu.memory_space<vmem>>, vector<128x128xf32>
    %30 = arith.addf %28, %29 : vector<128x128xf32>
    %cst_12 = arith.constant dense<0xFF800000> : vector<128xf32>
    %31 = vector.multi_reduction <maximumf>, %30, %cst_12 [0] : vector<128x128xf32> to vector<128xf32>
    %32 = vector.shape_cast %31 : vector<128xf32> to vector<1x128xf32>
    %33 = vector.broadcast %32 : vector<1x128xf32> to vector<128x128xf32>
    %34 = arith.subf %30, %33 : vector<128x128xf32>
    %35 = math.exp %34 : vector<128x128xf32>
    %cst_13 = arith.constant dense<0.000000e+00> : vector<128xf32>
    %36 = vector.multi_reduction <add>, %35, %cst_13 [0] : vector<128x128xf32> to vector<128xf32>
    %37 = vector.shape_cast %36 : vector<128xf32> to vector<1x128xf32>
    %38 = vector.broadcast %37 : vector<1x128xf32> to vector<128x128xf32>
    %39 = arith.divf %35, %38 : vector<128x128xf32>
    %40 = arith.truncf %6 : vector<64x128xf32> to vector<64x128xbf16>
    %41 = arith.truncf %39 : vector<128x128xf32> to vector<128x128xbf16>
    %cst_14 = arith.constant dense<0.000000e+00> : vector<64x128xf32>
    %42 = tpu.matmul %40, %41, %cst_14 {dimension_numbers = #tpu.dot_dimension_numbers<[1], [0], [0], [1], [0, 0, 1, 1], [], []>} : vector<64x128xbf16>, vector<128x128xbf16>, vector<64x128xf32> -> vector<64x128xf32>
    %43 = arith.truncf %42 : vector<64x128xf32> to vector<64x128xbf16>
    %c0_15 = arith.constant 0 : index
    %c0_16 = arith.constant 0 : index
    %44 = vector.load %arg3[%c0_15, %c0_16] : memref<128x128xbf16, #tpu.memory_space<vmem>>, vector<128x128xbf16>
    %cst_17 = arith.constant dense<0.000000e+00> : vector<64x128xf32>
    %45 = tpu.matmul %43, %44, %cst_17 {dimension_numbers = #tpu.dot_dimension_numbers<[1], [0], [0], [1], [0, 0, 1, 1], [], []>} : vector<64x128xbf16>, vector<128x128xbf16>, vector<64x128xf32> -> vector<64x128xf32>
    %c0_18 = arith.constant 0 : index
    %c0_19 = arith.constant 0 : index
    %46 = vector.load %arg4[%c0_18, %c0_19] : memref<1x128xf32, #tpu.memory_space<vmem>>, vector<1x128xf32>
    %47 = vector.broadcast %46 : vector<1x128xf32> to vector<64x128xf32>
    %48 = arith.addf %45, %47 : vector<64x128xf32>
    %c0_20 = arith.constant 0 : index
    %c0_21 = arith.constant 0 : index
    %49 = vector.load %arg7[%c0_20, %c0_21] : memref<64x128xf32, #tpu.memory_space<vmem>>, vector<64x128xf32>
    tpu.vector_store %arg7[%c0_20, %c0_21], %48 {strides = array<i32>} : memref<64x128xf32, #tpu.memory_space<vmem>>, vector<64x128xf32>,
    return
  }
  func.func @transform_0(%arg0: i32) -> (i32, i32) {
    %c0_i32 = arith.constant 0 : i32
    %c0_i32_0 = arith.constant 0 : i32
    return %arg0, %c0_i32 : i32, i32
  }
  func.func @transform_1(%arg0: i32) -> (i32, i32) {
    %c0_i32 = arith.constant 0 : i32
    %c0_i32_0 = arith.constant 0 : i32
    %c0_i32_1 = arith.constant 0 : i32
    return %c0_i32, %c0_i32_0 : i32, i32
  }
  func.func @transform_2(%arg0: i32) -> (i32, i32) {
    %c0_i32 = arith.constant 0 : i32
    %c0_i32_0 = arith.constant 0 : i32
    %c0_i32_1 = arith.constant 0 : i32
    return %c0_i32, %c0_i32_0 : i32, i32
  }
  func.func @transform_3(%arg0: i32) -> (i32, i32) {
    %c0_i32 = arith.constant 0 : i32
    %c0_i32_0 = arith.constant 0 : i32
    %c0_i32_1 = arith.constant 0 : i32
    return %c0_i32, %c0_i32_0 : i32, i32
  }
  func.func @transform_4(%arg0: i32) -> (i32, i32) {
    %c0_i32 = arith.constant 0 : i32
    %c0_i32_0 = arith.constant 0 : i32
    %c0_i32_1 = arith.constant 0 : i32
    return %c0_i32, %c0_i32_0 : i32, i32
  }
  func.func @transform_5(%arg0: i32) -> (i32, i32) {
    %c0_i32 = arith.constant 0 : i32
    %c0_i32_0 = arith.constant 0 : i32
    %c0_i32_1 = arith.constant 0 : i32
    return %c0_i32, %c0_i32_0 : i32, i32
  }
  func.func @transform_6(%arg0: i32) -> (i32, i32) {
    %c0_i32 = arith.constant 0 : i32
    %c0_i32_0 = arith.constant 0 : i32
    return %arg0, %c0_i32 : i32, i32
  }
}

</mosaic_0001>

<llo_original>
// kernel: channel_attention.1
$region0: #{channel_attention.1}
  #allocation0 [shape = 'u32[]', space=smem, size = 0x4, offset = 0x4, fixed_abs, tag = 'smem constant byte address 0x4 - core index']
  #allocation1 [shape = 'u32[144,128]{1,0:T(1,128)}', space=vmem, size = 0x12000, scoped, tag = 'internal scratch']
  %s0 = inlined_call_operand.vmem [shape: f32[128,128], index: 0, kind: input, shape index: {}]
  %s1 = inlined_call_operand.vmem [shape: bf16[128,384], index: 1, kind: input, shape index: {}]
  %s2 = inlined_call_operand.vmem [shape: bf16[128,128], index: 2, kind: input, shape index: {}]
  %s3 = inlined_call_operand.vmem [shape: f32[1,128], index: 3, kind: input, shape index: {}]
  %s4 = inlined_call_operand.vmem [shape: f32[1,128], index: 4, kind: input, shape index: {}]
  %s5 = inlined_call_operand.vmem [shape: f32[128,128], index: 5, kind: input, shape index: {}]
  %s6 = inlined_call_operand.hbm [shape: f32[128,128], index: 6, kind: output, shape index: {}]
  %s7 = sld [smem:[#allocation0]]
  $region57: #{channel_attention.1} parent=0
    _
  %s9 = ssub.s32 1, %s7
  %s10 = scalar_select 0, %s9, %s7
  $region1: #{channel_attention.1} parent=0
    #allocation2 [shape = 'u8[65536]{0}', space=vmem, size = 0x10000, scoped, tag = 'output window, operand 0']
    #allocation3 [shape = 's32[2]{0}', space=sflag, size = 0x8, scoped, tag = 'scoped memory for channel_attention.1']
    %11 = vsyncpa [#allocation3], 0
    %s12 = scalar_lea.sflag [#allocation3], 1
    %13 = vsyncpa %s12, 0
    loop: start=0, step=1, limit=4
    $region2: #{channel_attention.1} parent=1 // loop_pre_header
      _
    $region3: #{channel_attention.1} parent=1 // loop_header
      %s15 = sphi 0, %s19
      %p16 = scmp.ge.s32.totalorder %s15, 4
      %s25 = sphi 0, %s27
      %s28 = sphi 0, %s25
      %s29 = sphi 0, %s28
      %s45 = sphi 0, %s29
      %s49 = sphi 0, %s49
      %s51 = sphi 0, %s49
      %s52 = sphi 0, %s51
      %s66 = sphi 0, %s52
      %s70 = sphi 0, %s70
      %s72 = sphi 0, %s70
      %s73 = sphi 0, %s72
      %s87 = sphi 0, %s73
      %s91 = sphi 0, %s91
      %s93 = sphi 0, %s91
      %s94 = sphi 0, %s93
      %s108 = sphi 0, %s94
      %s112 = sphi 0, %s112
      %s114 = sphi 0, %s112
      %s115 = sphi 0, %s114
      %s129 = sphi 0, %s115
      %s133 = sphi 0, %s133
      %s135 = sphi 0, %s133
      %s136 = sphi 0, %s135
      %s150 = sphi 0, %s136
      %s156 = sphi 0, %s158
      %s159 = sphi 0, %s156
      %s160 = sphi 0, %s159
      %s176 = sphi 0, %s160
    $region4: #{channel_attention.1} parent=1 // loop_header_branch
      %18 = sbr.rel (%p16) target = $region8
    $region5: #{channel_attention.1} parent=1 // loop_body
      %s20 = ssub.s32 %s15, 1
      %s21 = ssub.s32 %s15, 2
      %s22 = sadd.s32 %s15, 1
      %s23 = ssub.s32 %s15, %s22
      %p24 = scmp.eq.s32.totalorder %s23, 0
      %s26 = sadd.s32 %s25, 1
      %s27 = scalar_select %p24, %s25, %s26
      %p30 = pneg %p24
      %p31 = scmp.eq.s32.totalorder %s15, 1
      %p32 = por %p30, %p31
      %p33 = scmp.ne.s32.totalorder %s25, %s28
      %p34 = scmp.eq.s32.totalorder %s15, 0
      %p35 = por %p33, %p34
      %p36 = scmp.ne.s32.totalorder %s25, %s28
      %p37 = scmp.eq.s32.totalorder %s20, 1
      %p38 = por %p36, %p37
      %p39 = scmp.ne.s32.totalorder %s28, %s29
      %p40 = scmp.eq.s32.totalorder %s20, 0
      %p41 = por %p39, %p40
      %p42 = scmp.ne.s32.totalorder %s28, %s29
      %p43 = scmp.eq.s32.totalorder %s21, 1
      %p44 = por %p42, %p43
      %p46 = scmp.ne.s32.totalorder %s29, %s45
      %p47 = scmp.eq.s32.totalorder %s21, 0
      %p48 = por %p46, %p47
      %s50 = sadd.s32 %s49, 1
      %p53 = scmp.eq.s32.totalorder %s15, 1
      %p54 = scmp.ne.s32.totalorder %s49, %s51
      %p55 = scmp.eq.s32.totalorder %s15, 0
      %p56 = por %p54, %p55
      %p57 = scmp.ne.s32.totalorder %s49, %s51
      %p58 = scmp.eq.s32.totalorder %s20, 1
      %p59 = por %p57, %p58
      %p60 = scmp.ne.s32.totalorder %s51, %s52
      %p61 = scmp.eq.s32.totalorder %s20, 0
      %p62 = por %p60, %p61
      %p63 = scmp.ne.s32.totalorder %s51, %s52
      %p64 = scmp.eq.s32.totalorder %s21, 1
      %p65 = por %p63, %p64
      %p67 = scmp.ne.s32.totalorder %s52, %s66
      %p68 = scmp.eq.s32.totalorder %s21, 0
      %p69 = por %p67, %p68
      %s71 = sadd.s32 %s70, 1
      %p74 = scmp.eq.s32.totalorder %s15, 1
      %p75 = scmp.ne.s32.totalorder %s70, %s72
      %p76 = scmp.eq.s32.totalorder %s15, 0
      %p77 = por %p75, %p76
      %p78 = scmp.ne.s32.totalorder %s70, %s72
      %p79 = scmp.eq.s32.totalorder %s20, 1
      %p80 = por %p78, %p79
      %p81 = scmp.ne.s32.totalorder %s72, %s73
      %p82 = scmp.eq.s32.totalorder %s20, 0
      %p83 = por %p81, %p82
      %p84 = scmp.ne.s32.totalorder %s72, %s73
      %p85 = scmp.eq.s32.totalorder %s21, 1
      %p86 = por %p84, %p85
      %p88 = scmp.ne.s32.totalorder %s73, %s87
      %p89 = scmp.eq.s32.totalorder %s21, 0
      %p90 = por %p88, %p89
      %s92 = sadd.s32 %s91, 1
      %p95 = scmp.eq.s32.totalorder %s15, 1
      %p96 = scmp.ne.s32.totalorder %s91, %s93
      %p97 = scmp.eq.s32.totalorder %s15, 0
      %p98 = por %p96, %p97
      %p99 = scmp.ne.s32.totalorder %s91, %s93
      %p100 = scmp.eq.s32.totalorder %s20, 1
      %p101 = por %p99, %p100
      %p102 = scmp.ne.s32.totalorder %s93, %s94
      %p103 = scmp.eq.s32.totalorder %s20, 0
      %p104 = por %p102, %p103
      %p105 = scmp.ne.s32.totalorder %s93, %s94
      %p106 = scmp.eq.s32.totalorder %s21, 1
      %p107 = por %p105, %p106
      %p109 = scmp.ne.s32.totalorder %s94, %s108
      %p110 = scmp.eq.s32.totalorder %s21, 0
      %p111 = por %p109, %p110
      %s113 = sadd.s32 %s112, 1
      %p116 = scmp.eq.s32.totalorder %s15, 1
      %p117 = scmp.ne.s32.totalorder %s112, %s114
      %p118 = scmp.eq.s32.totalorder %s15, 0
      %p119 = por %p117, %p118
      %p120 = scmp.ne.s32.totalorder %s112, %s114
      %p121 = scmp.eq.s32.totalorder %s20, 1
      %p122 = por %p120, %p121
      %p123 = scmp.ne.s32.totalorder %s114, %s115
      %p124 = scmp.eq.s32.totalorder %s20, 0
      %p125 = por %p123, %p124
      %p126 = scmp.ne.s32.totalorder %s114, %s115
      %p127 = scmp.eq.s32.totalorder %s21, 1
      %p128 = por %p126, %p127
      %p130 = scmp.ne.s32.totalorder %s115, %s129
      %p131 = scmp.eq.s32.totalorder %s21, 0
      %p132 = por %p130, %p131
      %s134 = sadd.s32 %s133, 1
      %p137 = scmp.eq.s32.totalorder %s15, 1
      %p138 = scmp.ne.s32.totalorder %s133, %s135
      %p139 = scmp.eq.s32.totalorder %s15, 0
      %p140 = por %p138, %p139
      %p141 = scmp.ne.s32.totalorder %s133, %s135
      %p142 = scmp.eq.s32.totalorder %s20, 1
      %p143 = por %p141, %p142
      %p144 = scmp.ne.s32.totalorder %s135, %s136
      %p145 = scmp.eq.s32.totalorder %s20, 0
      %p146 = por %p144, %p145
      %p147 = scmp.ne.s32.totalorder %s135, %s136
      %p148 = scmp.eq.s32.totalorder %s21, 1
      %p149 = por %p147, %p148
      %p151 = scmp.ne.s32.totalorder %s136, %s150
      %p152 = scmp.eq.s32.totalorder %s21, 0
      %p153 = por %p151, %p152
      %s154 = ssub.s32 %s15, %s22
      %p155 = scmp.eq.s32.totalorder %s154, 0
      %s157 = sadd.s32 %s156, 1
      %s158 = scalar_select %p155, %s156, %s157
      %p161 = pneg %p155
      %p162 = scmp.eq.s32.totalorder %s15, 1
      %p163 = por %p161, %p162
      %p164 = scmp.ne.s32.totalorder %s156, %s159
      %p165 = scmp.eq.s32.totalorder %s15, 0
      %p166 = por %p164, %p165
      %p167 = scmp.ne.s32.totalorder %s156, %s159
      %p168 = scmp.eq.s32.totalorder %s20, 1
      %p169 = por %p167, %p168
      %p170 = scmp.ne.s32.totalorder %s159, %s160
      %p171 = scmp.eq.s32.totalorder %s20, 0
      %p172 = por %p170, %p171
      %p173 = scmp.ne.s32.totalorder %s159, %s160
      %p174 = scmp.eq.s32.totalorder %s21, 1
      %p175 = por %p173, %p174
      %p177 = scmp.ne.s32.totalorder %s160, %s176
      %p178 = scmp.eq.s32.totalorder %s21, 0
      %p179 = por %p177, %p178
      %p180 = scmp.le.s32.totalorder 1, %s15
      %p181 = scmp.lt.s32.totalorder %s15, 3
      %p182 = pnand %p180, %p181
      %p183 = pneg %p182
      // Predicated region
      $region9: #{channel_attention.1} parent=5 // pred_check
        _
      $region10: #{channel_attention.1} parent=5 // pred_check_branch
        %185 = sbr.rel (%p182) target = $region12
      $region11: #{channel_attention.1} parent=5 // pred_region
        %s186 = ssub.s32 %s15, 1
        // Predicated region
        $region13: #{channel_attention.1} parent=11 // pred_check
          %p187 = pneg %p62
        $region14: #{channel_attention.1} parent=11 // pred_check_branch
          %189 = sbr.rel (%p187) target = $region16
        $region15: #{channel_attention.1} parent=11 // pred_region
          _
        $region16: #{channel_attention.1} parent=11 // pred_fallthru
          _
        // Predicated region
        $region17: #{channel_attention.1} parent=11 // pred_check
          %p190 = pneg %p83
        $region18: #{channel_attention.1} parent=11 // pred_check_branch
          %192 = sbr.rel (%p190) target = $region20
        $region19: #{channel_attention.1} parent=11 // pred_region
          _
        $region20: #{channel_attention.1} parent=11 // pred_fallthru
          _
        // Predicated region
        $region21: #{channel_attention.1} parent=11 // pred_check
          %p193 = pneg %p104
        $region22: #{channel_attention.1} parent=11 // pred_check_branch
          %195 = sbr.rel (%p193) target = $region24
        $region23: #{channel_attention.1} parent=11 // pred_region
          _
        $region24: #{channel_attention.1} parent=11 // pred_fallthru
          _
        // Predicated region
        $region25: #{channel_attention.1} parent=11 // pred_check
          %p196 = pneg %p125
        $region26: #{channel_attention.1} parent=11 // pred_check_branch
          %198 = sbr.rel (%p196) target = $region28
        $region27: #{channel_attention.1} parent=11 // pred_region
          _
        $region28: #{channel_attention.1} parent=11 // pred_fallthru
          _
        // Predicated region
        $region29: #{channel_attention.1} parent=11 // pred_check
          %p199 = pneg %p146
        $region30: #{channel_attention.1} parent=11 // pred_check_branch
          %201 = sbr.rel (%p199) target = $region32
        $region31: #{channel_attention.1} parent=11 // pred_region
          _
        $region32: #{channel_attention.1} parent=11 // pred_fallthru
          _
      $region12: #{channel_attention.1} parent=5 // pred_fallthru
        _
      %p202 = scmp.lt.s32.totalorder %s15, 2
      // Predicated region
      $region33: #{channel_attention.1} parent=5 // pred_check
        %p203 = pneg %p202
      $region34: #{channel_attention.1} parent=5 // pred_check_branch
        %205 = sbr.rel (%p203) target = $region36
      $region35: #{channel_attention.1} parent=5 // pred_region
        // Predicated region
        $region37: #{channel_attention.1} parent=35 // pred_check
          %p206 = pneg %p35
        $region38: #{channel_attention.1} parent=35 // pred_check_branch
          %208 = sbr.rel (%p206) target = $region40
        $region39: #{channel_attention.1} parent=35 // pred_region
          %s209 = smul.u32 8, %s15
          %p210 = scmp.lt.s32.totalorder %s209, 15
          %s211 = scalar_select %p210, %s209, 15
          %s212 = smul.addr %s211, 8
          %s213 = scalar_lea.vmem %s0, %s212
          %s214 = smul.u32 8, %s15
        $region40: #{channel_attention.1} parent=35 // pred_fallthru
          _
      $region36: #{channel_attention.1} parent=5 // pred_fallthru
        _
      %p215 = scmp.le.s32.totalorder 1, %s15
      %p216 = scmp.lt.s32.totalorder %s15, 3
      %p217 = pnand %p215, %p216
      %p218 = pneg %p217
      // Predicated region
      $region41: #{channel_attention.1} parent=5 // pred_check
        _
      $region42: #{channel_attention.1} parent=5 // pred_check_branch
        %220 = sbr.rel (%p217) target = $region44
      $region43: #{channel_attention.1} parent=5 // pred_region
        %s221 = ssub.s32 %s15, 1
        %s222 = smul.u32 8, %s20
        %p223 = scmp.lt.s32.totalorder %s222, 15
        %s224 = scalar_select %p223, %s222, 15
        %s225 = smul.addr %s224, 8
        %s226 = scalar_lea.vmem %s0, %s225
        %p227 = pneg %p41
        %p228 = pneg %p38
        %p229 = pneg %p62
        %p230 = pneg %p59
        %p231 = pneg %p83
        %p232 = pneg %p80
        %p233 = pneg %p104
        %p234 = pneg %p101
        %p235 = pneg %p125
        %p236 = pneg %p122
        %p237 = pneg %p146
        %p238 = pneg %p143
        %p239 = pneg %p172
        %p240 = pneg %p169
        %s241 = sand.u32 %s159, 1
        %s242 = scalar_lea.sflag [#allocation3], %s241
        %s243 = sand.u32 %s159, 1
        %s244 = smul.addr %s243, 64
        %s245 = scalar_lea.vmem [#allocation2], %s244
        %s246 = smul.u32 8, %s20
        %p247 = scmp.lt.s32.totalorder %s246, 15
        %s248 = scalar_select %p247, %s246, 15
        %s249 = smul.addr %s248, 8
        %s250 = scalar_lea.vmem %s0, %s249
        %s251 = smul.u32 8, %s20
        %s252 = smul.u32 8, %s20
        %v254 = vld [vmem:[%s250] sm:$0xff]
        %v255 = vld [vmem:[%s250 + $0x8] sm:$0xff]
        %v256 = vld [vmem:[%s250 + $0x10] sm:$0xff]
        %v257 = vld [vmem:[%s250 + $0x18] sm:$0xff]
        %v258 = vld [vmem:[%s250 + $0x20] sm:$0xff]
        %v259 = vld [vmem:[%s250 + $0x28] sm:$0xff]
        %v260 = vld [vmem:[%s250 + $0x30] sm:$0xff]
        %v261 = vld [vmem:[%s250 + $0x38] sm:$0xff]
        %v262 = vpack.c.bf16 %v255, %v254
        %v263 = vpack.c.bf16 %v257, %v256
        %v264 = vpack.c.bf16 %v259, %v258
        %v265 = vpack.c.bf16 %v261, %v260
        %v266 = vld [vmem:[%s1] sm:$0xff]
        %v267 = vld [vmem:[%s1 + $0x8] sm:$0xf]
        %v268 = vld [vmem:[%s1 + $0xc] sm:$0xff]
        %v269 = vld [vmem:[%s1 + $0x14] sm:$0xf]
        %v270 = vld [vmem:[%s1 + $0x18] sm:$0xff]
        %v271 = vld [vmem:[%s1 + $0x20] sm:$0xf]
        %v272 = vld [vmem:[%s1 + $0x24] sm:$0xff]
        %v273 = vld [vmem:[%s1 + $0x2c] sm:$0xf]
        %v274 = vld [vmem:[%s1 + $0x30] sm:$0xff]
        %v275 = vld [vmem:[%s1 + $0x38] sm:$0xf]
        %v276 = vld [vmem:[%s1 + $0x3c] sm:$0xff]
        %v277 = vld [vmem:[%s1 + $0x44] sm:$0xf]
        %v278 = vld [vmem:[%s1 + $0x48] sm:$0xff]
        %v279 = vld [vmem:[%s1 + $0x50] sm:$0xf]
        %v280 = vld [vmem:[%s1 + $0x54] sm:$0xff]
        %v281 = vld [vmem:[%s1 + $0x5c] sm:$0xf]
        %v282 = vld [vmem:[%s1 + $0x60] sm:$0xff]
        %v283 = vld [vmem:[%s1 + $0x68] sm:$0xf]
        %v284 = vld [vmem:[%s1 + $0x6c] sm:$0xff]
        %v285 = vld [vmem:[%s1 + $0x74] sm:$0xf]
        %v286 = vld [vmem:[%s1 + $0x78] sm:$0xff]
        %v287 = vld [vmem:[%s1 + $0x80] sm:$0xf]
        %v288 = vld [vmem:[%s1 + $0x84] sm:$0xff]
        %v289 = vld [vmem:[%s1 + $0x8c] sm:$0xf]
        %v290 = vld [vmem:[%s1 + $0x90] sm:$0xff]
        %v291 = vld [vmem:[%s1 + $0x98] sm:$0xf]
        %v292 = vld [vmem:[%s1 + $0x9c] sm:$0xff]
        %v293 = vld [vmem:[%s1 + $0xa4] sm:$0xf]
        %v294 = vld [vmem:[%s1 + $0xa8] sm:$0xff]
        %v295 = vld [vmem:[%s1 + $0xb0] sm:$0xf]
        %v296 = vld [vmem:[%s1 + $0xb4] sm:$0xff]
        %v297 = vld [vmem:[%s1 + $0xbc] sm:$0xf]
        %v330 = vunpack.c.l.b16 %v266
        %v331 = vunpack.c.h.b16 %v266
        %v332 = vunpack.c.l.b16 %v267
        %v333 = vunpack.c.l.b16 %v268
        %v334 = vunpack.c.h.b16 %v268
        %v335 = vunpack.c.l.b16 %v269
        %v336 = vunpack.c.l.b16 %v270
        %v337 = vunpack.c.h.b16 %v270
        %v338 = vunpack.c.l.b16 %v271
        %v339 = vunpack.c.l.b16 %v272
        %v340 = vunpack.c.h.b16 %v272
        %v341 = vunpack.c.l.b16 %v273
        %v342 = vunpack.c.l.b16 %v274
        %v343 = vunpack.c.h.b16 %v274
        %v344 = vunpack.c.l.b16 %v275
        %v345 = vunpack.c.l.b16 %v276
        %v346 = vunpack.c.h.b16 %v276
        %v347 = vunpack.c.l.b16 %v277
        %v348 = vunpack.c.l.b16 %v278
        %v349 = vunpack.c.h.b16 %v278
        %v350 = vunpack.c.l.b16 %v279
        %v351 = vunpack.c.l.b16 %v280
        %v352 = vunpack.c.h.b16 %v280
        %v353 = vunpack.c.l.b16 %v281
        %v354 = vunpack.c.l.b16 %v282
        %v355 = vunpack.c.h.b16 %v282
        %v356 = vunpack.c.l.b16 %v283
        %v357 = vunpack.c.l.b16 %v284
        %v358 = vunpack.c.h.b16 %v284
        %v359 = vunpack.c.l.b16 %v285
        %v360 = vunpack.c.l.b16 %v286
        %v361 = vunpack.c.h.b16 %v286
        %v362 = vunpack.c.l.b16 %v287
        %v363 = vunpack.c.l.b16 %v288
        %v364 = vunpack.c.h.b16 %v288
        %v365 = vunpack.c.l.b16 %v289
        %v366 = vunpack.c.l.b16 %v290
        %v367 = vunpack.c.h.b16 %v290
        %v368 = vunpack.c.l.b16 %v291
        %v369 = vunpack.c.l.b16 %v292
        %v370 = vunpack.c.h.b16 %v292
        %v371 = vunpack.c.l.b16 %v293
        %v372 = vunpack.c.l.b16 %v294
        %v373 = vunpack.c.h.b16 %v294
        %v374 = vunpack.c.l.b16 %v295
        %v375 = vunpack.c.l.b16 %v296
        %v376 = vunpack.c.h.b16 %v296
        %v377 = vunpack.c.l.b16 %v297
        %v378 = vpack.c.b16 %v333, %v330
        %v379 = vpack.c.b16 %v334, %v331
        %v380 = vpack.c.b16 %v335, %v332
        %v381 = vpack.c.b16 %v339, %v336
        %v382 = vpack.c.b16 %v340, %v337
        %v383 = vpack.c.b16 %v341, %v338
        %v384 = vpack.c.b16 %v345, %v342
        %v385 = vpack.c.b16 %v346, %v343
        %v386 = vpack.c.b16 %v347, %v344
        %v387 = vpack.c.b16 %v351, %v348
        %v388 = vpack.c.b16 %v352, %v349
        %v389 = vpack.c.b16 %v353, %v350
        %v390 = vpack.c.b16 %v357, %v354
        %v391 = vpack.c.b16 %v358, %v355
        %v392 = vpack.c.b16 %v359, %v356
        %v393 = vpack.c.b16 %v363, %v360
        %v394 = vpack.c.b16 %v364, %v361
        %v395 = vpack.c.b16 %v365, %v362
        %v396 = vpack.c.b16 %v369, %v366
        %v397 = vpack.c.b16 %v370, %v367
        %v398 = vpack.c.b16 %v371, %v368
        %v399 = vpack.c.b16 %v375, %v372
        %v400 = vpack.c.b16 %v376, %v373
        %v401 = vpack.c.b16 %v377, %v374
        %426 = vmatprep.subr.bf16.mxu0 %v379
        %427 = vmatpush1.bf16.msra.mxu0 %v378
        %428 = vmatprep.subr.bf16.mxu0 %v382
        %429 = vmatpush1.bf16.msra.mxu0 %v381
        %430 = vmatprep.subr.bf16.mxu0 %v385
        %431 = vmatpush1.bf16.msra.mxu0 %v384
        %432 = vmatprep.subr.bf16.mxu0 %v388
        %433 = vmatpush1.bf16.msra.mxu0 %v387
        %434 = vmatprep.subr.bf16.mxu0 %v391
        %435 = vmatpush1.bf16.msra.mxu0 %v390
        %436 = vmatprep.subr.bf16.mxu0 %v394
        %437 = vmatpush1.bf16.msra.mxu0 %v393
        %438 = vmatprep.subr.bf16.mxu0 %v397
        %439 = vmatpush1.bf16.msra.mxu0 %v396
        %440 = vmatprep.subr.bf16.mxu0 %v400
        %441 = vmatpush1.bf16.msra.mxu0 %v399
        %442 = vmatprep.subr.bf16.mxu0 0
        %443 = vmatpush1.bf16.msra.mxu0 0
        %444 = vmatprep.subr.bf16.mxu0 0
        %445 = vmatpush1.bf16.msra.mxu0 0
        %446 = vmatprep.subr.bf16.mxu0 0
        %447 = vmatpush1.bf16.msra.mxu0 0
        %448 = vmatprep.subr.bf16.mxu0 0
        %449 = vmatpush1.bf16.msra.mxu0 0
        %450 = vmatprep.subr.bf16.mxu0 0
        %451 = vmatpush1.bf16.msra.mxu0 0
        %452 = vmatprep.subr.bf16.mxu0 0
        %453 = vmatpush1.bf16.msra.mxu0 0
        %454 = vmatprep.subr.bf16.mxu0 0
        %455 = vmatpush1.bf16.msra.mxu0 0
        %456 = vmatprep.subr.bf16.mxu0 0
        %457 = vmatpush1.bf16.msra.mxu0 0
        %458 = vmatprep.mubr.bf16.mxu0 0
        %459 = vmatmul.mubr.bf16.gmra.mrb[0].mxu0 %v262
        %v460 = vpop.f32.mrb[0].mxu0
        %v461 = vadd.f32 0.0, %v460
        %v462 = vpop.f32.mrb[0].mxu0
        %v463 = vadd.f32 0.0, %v462
        %v464 = vpop.f32.mrb[0].mxu0
        %v465 = vadd.f32 0.0, %v464
        %v466 = vpop.f32.mrb[0].mxu0
        %v467 = vadd.f32 0.0, %v466
        %468 = vmatprep.mubr.bf16.mxu0 0
        %469 = vmatmul.mubr.bf16.gmra.mrb[0].mxu0 %v263
        %v470 = vpop.f32.mrb[0].mxu0
        %v471 = vadd.f32 0.0, %v470
        %v472 = vpop.f32.mrb[0].mxu0
        %v473 = vadd.f32 0.0, %v472
        %v474 = vpop.f32.mrb[0].mxu0
        %v475 = vadd.f32 0.0, %v474
        %v476 = vpop.f32.mrb[0].mxu0
        %v477 = vadd.f32 0.0, %v476
        %478 = vmatprep.mubr.bf16.mxu0 0
        %479 = vmatmul.mubr.bf16.gmra.mrb[0].mxu0 %v264
        %v480 = vpop.f32.mrb[0].mxu0
        %v481 = vadd.f32 0.0, %v480
        %v482 = vpop.f32.mrb[0].mxu0
        %v483 = vadd.f32 0.0, %v482
        %v484 = vpop.f32.mrb[0].mxu0
        %v485 = vadd.f32 0.0, %v484
        %v486 = vpop.f32.mrb[0].mxu0
        %v487 = vadd.f32 0.0, %v486
        %488 = vmatprep.mubr.bf16.mxu0 0
        %489 = vmatmul.mubr.bf16.gmra.mrb[0].mxu0 %v265
        %v490 = vpop.f32.mrb[0].mxu0
        %v491 = vadd.f32 0.0, %v490
        %v492 = vpop.f32.mrb[0].mxu0
        %v493 = vadd.f32 0.0, %v492
        %v494 = vpop.f32.mrb[0].mxu0
        %v495 = vadd.f32 0.0, %v494
        %v496 = vpop.f32.mrb[0].mxu0
        %v497 = vadd.f32 0.0, %v496
        %498 = vdwg.mxu0
        %499 = vmatprep.subr.bf16.mxu0 0
        %500 = vmatpush1.bf16.msra.mxu0 %v380
        %501 = vmatprep.subr.bf16.mxu0 0
        %502 = vmatpush1.bf16.msra.mxu0 %v383
        %503 = vmatprep.subr.bf16.mxu0 0
        %504 = vmatpush1.bf16.msra.mxu0 %v386
        %505 = vmatprep.subr.bf16.mxu0 0
        %506 = vmatpush1.bf16.msra.mxu0 %v389
        %507 = vmatprep.subr.bf16.mxu0 0
        %508 = vmatpush1.bf16.msra.mxu0 %v392
        %509 = vmatprep.subr.bf16.mxu0 0
        %510 = vmatpush1.bf16.msra.mxu0 %v395
        %511 = vmatprep.subr.bf16.mxu0 0
        %512 = vmatpush1.bf16.msra.mxu0 %v398
        %513 = vmatprep.subr.bf16.mxu0 0
        %514 = vmatpush1.bf16.msra.mxu0 %v401
        %515 = vmatprep.subr.bf16.mxu0 0
        %516 = vmatpush1.bf16.msra.mxu0 0
        %517 = vmatprep.subr.bf16.mxu0 0
        %518 = vmatpush1.bf16.msra.mxu0 0
        %519 = vmatprep.subr.bf16.mxu0 0
        %520 = vmatpush1.bf16.msra.mxu0 0
        %521 = vmatprep.subr.bf16.mxu0 0
        %522 = vmatpush1.bf16.msra.mxu0 0
        %523 = vmatprep.subr.bf16.mxu0 0
        %524 = vmatpush1.bf16.msra.mxu0 0
        %525 = vmatprep.subr.bf16.mxu0 0
        %526 = vmatpush1.bf16.msra.mxu0 0
        %527 = vmatprep.subr.bf16.mxu0 0
        %528 = vmatpush1.bf16.msra.mxu0 0
        %529 = vmatprep.subr.bf16.mxu0 0
        %530 = vmatpush1.bf16.msra.mxu0 0
        %531 = vmatprep.mubr.bf16.mxu0 0
        %532 = vmatmul.mubr.bf16.gmra.mrb[0].mxu0 %v262
        %v533 = vpop.f32.mrb[0].mxu0
        %v534 = vadd.f32 0.0, %v533
        %v535 = vpop.f32.mrb[0].mxu0
        %v536 = vpop.f32.mrb[0].mxu0
        %v537 = vadd.f32 0.0, %v536
        %v538 = vpop.f32.mrb[0].mxu0
        %539 = vmatprep.mubr.bf16.mxu0 0
        %540 = vmatmul.mubr.bf16.gmra.mrb[0].mxu0 %v263
        %v541 = vpop.f32.mrb[0].mxu0
        %v542 = vadd.f32 0.0, %v541
        %v543 = vpop.f32.mrb[0].mxu0
        %v544 = vpop.f32.mrb[0].mxu0
        %v545 = vadd.f32 0.0, %v544
        %v546 = vpop.f32.mrb[0].mxu0
        %547 = vmatprep.mubr.bf16.mxu0 0
        %548 = vmatmul.mubr.bf16.gmra.mrb[0].mxu0 %v264
        %v549 = vpop.f32.mrb[0].mxu0
        %v550 = vadd.f32 0.0, %v549
        %v551 = vpop.f32.mrb[0].mxu0
        %v552 = vpop.f32.mrb[0].mxu0
        %v553 = vadd.f32 0.0, %v552
        %v554 = vpop.f32.mrb[0].mxu0
        %555 = vmatprep.mubr.bf16.mxu0 0
        %556 = vmatmul.mubr.bf16.gmra.mrb[0].mxu0 %v265
        %v557 = vpop.f32.mrb[0].mxu0
        %v558 = vadd.f32 0.0, %v557
        %v559 = vpop.f32.mrb[0].mxu0
        %v560 = vpop.f32.mrb[0].mxu0
        %v561 = vadd.f32 0.0, %v560
        %v562 = vpop.f32.mrb[0].mxu0
        %563 = vdwg.mxu0
        %v564 = vmul.f32 %v461, %v461
        %v565 = vmul.f32 %v465, %v465
        %v566 = vmul.f32 %v471, %v471
        %v567 = vmul.f32 %v475, %v475
        %v568 = vmul.f32 %v481, %v481
        %v569 = vmul.f32 %v485, %v485
        %v570 = vmul.f32 %v491, %v491
        %v571 = vmul.f32 %v495, %v495
        %v572 = vadd.f32 %v564, %v565
        %v573 = vadd.f32 %v572, %v566
        %v574 = vadd.f32 %v573, %v567
        %v575 = vadd.f32 %v574, %v568
        %v576 = vadd.f32 %v575, %v569
        %v577 = vadd.f32 %v576, %v570
        %v578 = vadd.f32 %v577, %v571
        %v579 = vrot.slane %v578, 4
        %v580 = vadd.f32 %v578, %v579
        %v581 = vrot.slane %v580, 2
        %v582 = vadd.f32 %v580, %v581
        %v583 = vrot.slane %v582, 1
        %v584 = vadd.f32 %v582, %v583
        %v585 = vmax.f32 %v584, 1e-24
        %v586 = vrsqrt.pop %v585
        %v587 = vmul.f32 %v461, %v586
        %v588 = vmul.f32 %v465, %v586
        %v589 = vmul.f32 %v471, %v586
        %v590 = vmul.f32 %v475, %v586
        %v591 = vmul.f32 %v481, %v586
        %v592 = vmul.f32 %v485, %v586
        %v593 = vmul.f32 %v491, %v586
        %v594 = vmul.f32 %v495, %v586
        %v595 = vmul.f32 %v463, %v463
        %v596 = vmul.f32 %v467, %v467
        %v597 = vmul.f32 %v473, %v473
        %v598 = vmul.f32 %v477, %v477
        %v599 = vmul.f32 %v483, %v483
        %v600 = vmul.f32 %v487, %v487
        %v601 = vmul.f32 %v493, %v493
        %v602 = vmul.f32 %v497, %v497
        %v603 = vadd.f32 %v595, %v596
        %v604 = vadd.f32 %v603, %v597
        %v605 = vadd.f32 %v604, %v598
        %v606 = vadd.f32 %v605, %v599
        %v607 = vadd.f32 %v606, %v600
        %v608 = vadd.f32 %v607, %v601
        %v609 = vadd.f32 %v608, %v602
        %v610 = vrot.slane %v609, 4
        %v611 = vadd.f32 %v609, %v610
        %v612 = vrot.slane %v611, 2
        %v613 = vadd.f32 %v611, %v612
        %v614 = vrot.slane %v613, 1
        %v615 = vadd.f32 %v613, %v614
        %v616 = vmax.f32 %v615, 1e-24
        %v617 = vrsqrt.pop %v616
        %v618 = vmul.f32 %v463, %v617
        %v619 = vmul.f32 %v467, %v617
        %v620 = vmul.f32 %v473, %v617
        %v621 = vmul.f32 %v477, %v617
        %v622 = vmul.f32 %v483, %v617
        %v623 = vmul.f32 %v487, %v617
        %v624 = vmul.f32 %v493, %v617
        %v625 = vmul.f32 %v497, %v617
        %v626 = vld [vmem:[%s4] sm:$0x1]
        %v628 = vlaneseq
        %v629 = vshrl.u32 %v628, 7
        %v630 = vsub.s32 0, %v629
        %v631 = vrot.slane %v626, %v630
        %v633 = vmul.f32 %v618, %v631
        %v634 = vmul.f32 %v619, %v631
        %v635 = vmul.f32 %v620, %v631
        %v636 = vmul.f32 %v621, %v631
        %v637 = vmul.f32 %v622, %v631
        %v638 = vmul.f32 %v623, %v631
        %v639 = vmul.f32 %v624, %v631
        %v640 = vmul.f32 %v625, %v631
        %v641 = vpack.c.bf16 %v634, %v633
        %v642 = vpack.c.bf16 %v636, %v635
        %v643 = vpack.c.bf16 %v638, %v637
        %v644 = vpack.c.bf16 %v640, %v639
        %v645 = vpack.c.bf16 %v588, %v587
        %v646 = vpack.c.bf16 %v590, %v589
        %v647 = vpack.c.bf16 %v592, %v591
        %v648 = vpack.c.bf16 %v594, %v593
        %v649 = vld [vmem:[%s5] sm:$0xff]
        %v650 = vld [vmem:[%s5 + $0x8] sm:$0xff]
        %v651 = vld [vmem:[%s5 + $0x10] sm:$0xff]
        %v652 = vld [vmem:[%s5 + $0x18] sm:$0xff]
        %v653 = vld [vmem:[%s5 + $0x20] sm:$0xff]
        %v654 = vld [vmem:[%s5 + $0x28] sm:$0xff]
        %v655 = vld [vmem:[%s5 + $0x30] sm:$0xff]
        %v656 = vld [vmem:[%s5 + $0x38] sm:$0xff]
        %v657 = vld [vmem:[%s5 + $0x40] sm:$0xff]
        %v658 = vld [vmem:[%s5 + $0x48] sm:$0xff]
        %v659 = vld [vmem:[%s5 + $0x50] sm:$0xff]
        %v660 = vld [vmem:[%s5 + $0x58] sm:$0xff]
        %v661 = vld [vmem:[%s5 + $0x60] sm:$0xff]
        %v662 = vld [vmem:[%s5 + $0x68] sm:$0xff]
        %v663 = vld [vmem:[%s5 + $0x70] sm:$0xff]
        %v664 = vld [vmem:[%s5 + $0x78] sm:$0xff]
        %665 = vxpose.xlu0.c.b16.start [1/8] %v641, 128
        %666 = vxpose.xlu0.c.b16.cont [2/8] %v642, 128
        %667 = vxpose.xlu0.c.b16.cont [3/8] %v643, 128
        %668 = vxpose.xlu0.c.b16.cont [4/8] %v644, 128
        %669 = vxpose.xlu0.c.b16.cont [5/8] 0, 128
        %670 = vxpose.xlu0.c.b16.cont [6/8] 0, 128
        %671 = vxpose.xlu0.c.b16.cont [7/8] 0, 128
        %672 = vxpose.xlu0.c.b16.end [8/8] 0, 128
        %v673 = vpop.trf.xlu0
        %v674 = vpop.trf.xlu0
        %v675 = vpop.trf.xlu0
        %v676 = vpop.trf.xlu0
        %v677 = vpop.trf.xlu0
        %v678 = vpop.trf.xlu0
        %v679 = vpop.trf.xlu0
        %v680 = vpop.trf.xlu0
        %vm681 = vcmask 523264
        %v683 = vsel %vm681, %v673, 0
        %v686 = vsel %vm681, %v674, 0
        %v689 = vsel %vm681, %v675, 0
        %v692 = vsel %vm681, %v676, 0
        %v695 = vsel %vm681, %v677, 0
        %v698 = vsel %vm681, %v678, 0
        %v701 = vsel %vm681, %v679, 0
        %v704 = vsel %vm681, %v680, 0
        %706 = vmatprep.subr.bf16.mxu0 0
        %707 = vmatpush1.bf16.msra.mxu0 %v645
        %708 = vmatprep.subr.bf16.mxu0 0
        %709 = vmatpush1.bf16.msra.mxu0 %v646
        %710 = vmatprep.subr.bf16.mxu0 0
        %711 = vmatpush1.bf16.msra.mxu0 %v647
        %712 = vmatprep.subr.bf16.mxu0 0
        %713 = vmatpush1.bf16.msra.mxu0 %v648
        %714 = vmatprep.subr.bf16.mxu0 0
        %715 = vmatpush1.bf16.msra.mxu0 0
        %716 = vmatprep.subr.bf16.mxu0 0
        %717 = vmatpush1.bf16.msra.mxu0 0
        %718 = vmatprep.subr.bf16.mxu0 0
        %719 = vmatpush1.bf16.msra.mxu0 0
        %720 = vmatprep.subr.bf16.mxu0 0
        %721 = vmatpush1.bf16.msra.mxu0 0
        %722 = vmatprep.subr.bf16.mxu0 0
        %723 = vmatpush1.bf16.msra.mxu0 0
        %724 = vmatprep.subr.bf16.mxu0 0
        %725 = vmatpush1.bf16.msra.mxu0 0
        %726 = vmatprep.subr.bf16.mxu0 0
        %727 = vmatpush1.bf16.msra.mxu0 0
        %728 = vmatprep.subr.bf16.mxu0 0
        %729 = vmatpush1.bf16.msra.mxu0 0
        %730 = vmatprep.subr.bf16.mxu0 0
        %731 = vmatpush1.bf16.msra.mxu0 0
        %732 = vmatprep.subr.bf16.mxu0 0
        %733 = vmatpush1.bf16.msra.mxu0 0
        %734 = vmatprep.subr.bf16.mxu0 0
        %735 = vmatpush1.bf16.msra.mxu0 0
        %736 = vmatprep.subr.bf16.mxu0 0
        %737 = vmatpush1.bf16.msra.mxu0 0
        %738 = vmatprep.mubr.bf16.mxu0 0
        %739 = vmatmul.mubr.bf16.gmra.mrb[0].mxu0 %v683
        %v740 = vpop.f32.mrb[0].mxu0
        %v741 = vadd.f32 %v649, %v740
        %v742 = vpop.f32.mrb[0].mxu0
        %v743 = vpop.f32.mrb[0].mxu0
        %v744 = vadd.f32 %v650, %v743
        %v745 = vpop.f32.mrb[0].mxu0
        %746 = vmatprep.mubr.bf16.mxu0 0
        %747 = vmatmul.mubr.bf16.gmra.mrb[0].mxu0 %v686
        %v748 = vpop.f32.mrb[0].mxu0
        %v749 = vadd.f32 %v651, %v748
        %v750 = vpop.f32.mrb[0].mxu0
        %v751 = vpop.f32.mrb[0].mxu0
        %v752 = vadd.f32 %v652, %v751
        %v753 = vpop.f32.mrb[0].mxu0
        %754 = vmatprep.mubr.bf16.mxu0 0
        %755 = vmatmul.mubr.bf16.gmra.mrb[0].mxu0 %v689
        %v756 = vpop.f32.mrb[0].mxu0
        %v757 = vadd.f32 %v653, %v756
        %v758 = vpop.f32.mrb[0].mxu0
        %v759 = vpop.f32.mrb[0].mxu0
        %v760 = vadd.f32 %v654, %v759
        %v761 = vpop.f32.mrb[0].mxu0
        %762 = vmatprep.mubr.bf16.mxu0 0
        %763 = vmatmul.mubr.bf16.gmra.mrb[0].mxu0 %v692
        %v764 = vpop.f32.mrb[0].mxu0
        %v765 = vadd.f32 %v655, %v764
        %v766 = vpop.f32.mrb[0].mxu0
        %v767 = vpop.f32.mrb[0].mxu0
        %v768 = vadd.f32 %v656, %v767
        %v769 = vpop.f32.mrb[0].mxu0
        %770 = vmatprep.mubr.bf16.mxu0 0
        %771 = vmatmul.mubr.bf16.gmra.mrb[0].mxu0 %v695
        %v772 = vpop.f32.mrb[0].mxu0
        %v773 = vadd.f32 %v657, %v772
        %v774 = vpop.f32.mrb[0].mxu0
        %v775 = vpop.f32.mrb[0].mxu0
        %v776 = vadd.f32 %v658, %v775
        %v777 = vpop.f32.mrb[0].mxu0
        %778 = vmatprep.mubr.bf16.mxu0 0
        %779 = vmatmul.mubr.bf16.gmra.mrb[0].mxu0 %v698
        %v780 = vpop.f32.mrb[0].mxu0
        %v781 = vadd.f32 %v659, %v780
        %v782 = vpop.f32.mrb[0].mxu0
        %v783 = vpop.f32.mrb[0].mxu0
        %v784 = vadd.f32 %v660, %v783
        %v785 = vpop.f32.mrb[0].mxu0
        %786 = vmatprep.mubr.bf16.mxu0 0
        %787 = vmatmul.mubr.bf16.gmra.mrb[0].mxu0 %v701
        %v788 = vpop.f32.mrb[0].mxu0
        %v789 = vadd.f32 %v661, %v788
        %v790 = vpop.f32.mrb[0].mxu0
        %v791 = vpop.f32.mrb[0].mxu0
        %v792 = vadd.f32 %v662, %v791
        %v793 = vpop.f32.mrb[0].mxu0
        %794 = vmatprep.mubr.bf16.mxu0 0
        %795 = vmatmul.mubr.bf16.gmra.mrb[0].mxu0 %v704
        %v796 = vpop.f32.mrb[0].mxu0
        %v797 = vadd.f32 %v663, %v796
        %v798 = vpop.f32.mrb[0].mxu0
        %v799 = vpop.f32.mrb[0].mxu0
        %v800 = vadd.f32 %v664, %v799
        %v801 = vpop.f32.mrb[0].mxu0
        %802 = vdwg.mxu0
        %v803 = vmax.f32 %v741, %v757
        %v804 = vmax.f32 %v744, %v760
        %v805 = vmax.f32 %v749, %v765
        %v806 = vmax.f32 %v752, %v768
        %v807 = vmax.f32 %v803, %v773
        %v808 = vmax.f32 %v804, %v776
        %v809 = vmax.f32 %v805, %v781
        %v810 = vmax.f32 %v806, %v784
        %v811 = vmax.f32 %v807, %v789
        %v812 = vmax.f32 %v808, %v792
        %v813 = vmax.f32 %v809, %v797
        %v814 = vmax.f32 %v810, %v800
        %v815 = vmax.f32 %v811, %v812
        %v816 = vmax.f32 %v813, %v814
        %v817 = vmax.f32 %v815, %v816
        %v818 = vrot.slane %v817, 4
        %v819 = vmax.f32 %v817, %v818
        %v820 = vrot.slane %v819, 2
        %v821 = vmax.f32 %v819, %v820
        %v822 = vrot.slane %v821, 1
        %v823 = vmax.f32 %v821, %v822
        %v824 = vsub.f32 %v741, %v823
        %v825 = vsub.f32 %v744, %v823
        %v826 = vsub.f32 %v749, %v823
        %v827 = vsub.f32 %v752, %v823
        %v828 = vsub.f32 %v757, %v823
        %v829 = vsub.f32 %v760, %v823
        %v830 = vsub.f32 %v765, %v823
        %v831 = vsub.f32 %v768, %v823
        %v832 = vsub.f32 %v773, %v823
        %v833 = vsub.f32 %v776, %v823
        %v834 = vsub.f32 %v781, %v823
        %v835 = vsub.f32 %v784, %v823
        %v836 = vsub.f32 %v789, %v823
        %v837 = vsub.f32 %v792, %v823
        %v838 = vsub.f32 %v797, %v823
        %v839 = vsub.f32 %v800, %v823
        %v840 = vmul.f32 %v824, 1.442695
        %v841 = vpow.pop %v840
        %v842 = vmul.f32 %v825, 1.442695
        %v843 = vpow.pop %v842
        %v844 = vmul.f32 %v826, 1.442695
        %v845 = vpow.pop %v844
        %v846 = vmul.f32 %v827, 1.442695
        %v847 = vpow.pop %v846
        %v848 = vmul.f32 %v828, 1.442695
        %v849 = vpow.pop %v848
        %v850 = vmul.f32 %v829, 1.442695
        %v851 = vpow.pop %v850
        %v852 = vmul.f32 %v830, 1.442695
        %v853 = vpow.pop %v852
        %v854 = vmul.f32 %v831, 1.442695
        %v855 = vpow.pop %v854
        %v856 = vmul.f32 %v832, 1.442695
        %v857 = vpow.pop %v856
        %v858 = vmul.f32 %v833, 1.442695
        %v859 = vpow.pop %v858
        %v860 = vmul.f32 %v834, 1.442695
        %v861 = vpow.pop %v860
        %v862 = vmul.f32 %v835, 1.442695
        %v863 = vpow.pop %v862
        %v864 = vmul.f32 %v836, 1.442695
        %v865 = vpow.pop %v864
        %v866 = vmul.f32 %v837, 1.442695
        %v867 = vpow.pop %v866
        %v868 = vmul.f32 %v838, 1.442695
        %v869 = vpow.pop %v868
        %v870 = vmul.f32 %v839, 1.442695
        %v871 = vpow.pop %v870
        %v872 = vadd.f32 %v841, %v843
        %v873 = vadd.f32 %v872, %v845
        %v874 = vadd.f32 %v873, %v847
        %v875 = vadd.f32 %v874, %v849
        %v876 = vadd.f32 %v875, %v851
        %v877 = vadd.f32 %v876, %v853
        %v878 = vadd.f32 %v877, %v855
        %v879 = vadd.f32 %v878, %v857
        %v880 = vadd.f32 %v879, %v859
        %v881 = vadd.f32 %v880, %v861
        %v882 = vadd.f32 %v881, %v863
        %v883 = vadd.f32 %v882, %v865
        %v884 = vadd.f32 %v883, %v867
        %v885 = vadd.f32 %v884, %v869
        %v886 = vadd.f32 %v885, %v871
        %v887 = vrot.slane %v886, 4
        %v888 = vadd.f32 %v886, %v887
        %v889 = vrot.slane %v888, 2
        %v890 = vadd.f32 %v888, %v889
        %v891 = vrot.slane %v890, 1
        %v892 = vadd.f32 %v890, %v891
        %v893 = vrcp.pop %v892
        %v894 = vmul.f32 %v841, %v893
        %v895 = vmul.f32 %v843, %v893
        %v896 = vmul.f32 %v845, %v893
        %v897 = vmul.f32 %v847, %v893
        %v898 = vmul.f32 %v849, %v893
        %v899 = vmul.f32 %v851, %v893
        %v900 = vmul.f32 %v853, %v893
        %v901 = vmul.f32 %v855, %v893
        %v902 = vmul.f32 %v857, %v893
        %v903 = vmul.f32 %v859, %v893
        %v904 = vmul.f32 %v861, %v893
        %v905 = vmul.f32 %v863, %v893
        %v906 = vmul.f32 %v865, %v893
        %v907 = vmul.f32 %v867, %v893
        %v908 = vmul.f32 %v869, %v893
        %v909 = vmul.f32 %v871, %v893
        %v910 = vpack.c.bf16 %v537, %v534
        %v911 = vpack.c.bf16 %v545, %v542
        %v912 = vpack.c.bf16 %v553, %v550
        %v913 = vpack.c.bf16 %v561, %v558
        %v914 = vpack.c.bf16 %v895, %v894
        %v915 = vpack.c.bf16 %v897, %v896
        %v916 = vpack.c.bf16 %v899, %v898
        %v917 = vpack.c.bf16 %v901, %v900
        %v918 = vpack.c.bf16 %v903, %v902
        %v919 = vpack.c.bf16 %v905, %v904
        %v920 = vpack.c.bf16 %v907, %v906
        %v921 = vpack.c.bf16 %v909, %v908
        %922 = vmatprep.subr.bf16.mxu0 0
        %923 = vmatpush1.bf16.msra.mxu0 %v914
        %924 = vmatprep.subr.bf16.mxu0 0
        %925 = vmatpush1.bf16.msra.mxu0 %v915
        %926 = vmatprep.subr.bf16.mxu0 0
        %927 = vmatpush1.bf16.msra.mxu0 %v916
        %928 = vmatprep.subr.bf16.mxu0 0
        %929 = vmatpush1.bf16.msra.mxu0 %v917
        %930 = vmatprep.subr.bf16.mxu0 0
        %931 = vmatpush1.bf16.msra.mxu0 %v918
        %932 = vmatprep.subr.bf16.mxu0 0
        %933 = vmatpush1.bf16.msra.mxu0 %v919
        %934 = vmatprep.subr.bf16.mxu0 0
        %935 = vmatpush1.bf16.msra.mxu0 %v920
        %936 = vmatprep.subr.bf16.mxu0 0
        %937 = vmatpush1.bf16.msra.mxu0 %v921
        %938 = vmatprep.subr.bf16.mxu0 0
        %939 = vmatpush1.bf16.msra.mxu0 0
        %940 = vmatprep.subr.bf16.mxu0 0
        %941 = vmatpush1.bf16.msra.mxu0 0
        %942 = vmatprep.subr.bf16.mxu0 0
        %943 = vmatpush1.bf16.msra.mxu0 0
        %944 = vmatprep.subr.bf16.mxu0 0
        %945 = vmatpush1.bf16.msra.mxu0 0
        %946 = vmatprep.subr.bf16.mxu0 0
        %947 = vmatpush1.bf16.msra.mxu0 0
        %948 = vmatprep.subr.bf16.mxu0 0
        %949 = vmatpush1.bf16.msra.mxu0 0
        %950 = vmatprep.subr.bf16.mxu0 0
        %951 = vmatpush1.bf16.msra.mxu0 0
        %952 = vmatprep.subr.bf16.mxu0 0
        %953 = vmatpush1.bf16.msra.mxu0 0
        %954 = vmatprep.mubr.bf16.mxu0 0
        %955 = vmatmul.mubr.bf16.gmra.mrb[0].mxu0 %v910
        %v956 = vpop.f32.mrb[0].mxu0
        %v957 = vadd.f32 0.0, %v956
        %v958 = vpop.f32.mrb[0].mxu0
        %v959 = vpop.f32.mrb[0].mxu0
        %v960 = vadd.f32 0.0, %v959
        %v961 = vpop.f32.mrb[0].mxu0
        %962 = vmatprep.mubr.bf16.mxu0 0
        %963 = vmatmul.mubr.bf16.gmra.mrb[0].mxu0 %v911
        %v964 = vpop.f32.mrb[0].mxu0
        %v965 = vadd.f32 0.0, %v964
        %v966 = vpop.f32.mrb[0].mxu0
        %v967 = vpop.f32.mrb[0].mxu0
        %v968 = vadd.f32 0.0, %v967
        %v969 = vpop.f32.mrb[0].mxu0
        %970 = vmatprep.mubr.bf16.mxu0 0
        %971 = vmatmul.mubr.bf16.gmra.mrb[0].mxu0 %v912
        %v972 = vpop.f32.mrb[0].mxu0
        %v973 = vadd.f32 0.0, %v972
        %v974 = vpop.f32.mrb[0].mxu0
        %v975 = vpop.f32.mrb[0].mxu0
        %v976 = vadd.f32 0.0, %v975
        %v977 = vpop.f32.mrb[0].mxu0
        %978 = vmatprep.mubr.bf16.mxu0 0
        %979 = vmatmul.mubr.bf16.gmra.mrb[0].mxu0 %v913
        %v980 = vpop.f32.mrb[0].mxu0
        %v981 = vadd.f32 0.0, %v980
        %v982 = vpop.f32.mrb[0].mxu0
        %v983 = vpop.f32.mrb[0].mxu0
        %v984 = vadd.f32 0.0, %v983
        %v985 = vpop.f32.mrb[0].mxu0
        %986 = vdwg.mxu0
        %v987 = vpack.c.bf16 %v960, %v957
        %v988 = vpack.c.bf16 %v968, %v965
        %v989 = vpack.c.bf16 %v976, %v973
        %v990 = vpack.c.bf16 %v984, %v981
        %v991 = vld [vmem:[%s2] sm:$0xf]
        %v992 = vld [vmem:[%s2 + $0x4] sm:$0xf]
        %v993 = vld [vmem:[%s2 + $0x8] sm:$0xf]
        %v994 = vld [vmem:[%s2 + $0xc] sm:$0xf]
        %v995 = vld [vmem:[%s2 + $0x10] sm:$0xf]
        %v996 = vld [vmem:[%s2 + $0x14] sm:$0xf]
        %v997 = vld [vmem:[%s2 + $0x18] sm:$0xf]
        %v998 = vld [vmem:[%s2 + $0x1c] sm:$0xf]
        %v999 = vld [vmem:[%s2 + $0x20] sm:$0xf]
        %v1000 = vld [vmem:[%s2 + $0x24] sm:$0xf]
        %v1001 = vld [vmem:[%s2 + $0x28] sm:$0xf]
        %v1002 = vld [vmem:[%s2 + $0x2c] sm:$0xf]
        %v1003 = vld [vmem:[%s2 + $0x30] sm:$0xf]
        %v1004 = vld [vmem:[%s2 + $0x34] sm:$0xf]
        %v1005 = vld [vmem:[%s2 + $0x38] sm:$0xf]
        %v1006 = vld [vmem:[%s2 + $0x3c] sm:$0xf]
        %v1007 = vld [vmem:[%s3] sm:$0x1]
        %v1009 = vlaneseq
        %v1010 = vshrl.u32 %v1009, 7
        %v1011 = vsub.s32 0, %v1010
        %v1012 = vrot.slane %v1007, %v1011
        %v1030 = vunpack.c.l.b16 %v991
        %v1031 = vunpack.c.l.b16 %v992
        %v1032 = vunpack.c.l.b16 %v993
        %v1033 = vunpack.c.l.b16 %v994
        %v1034 = vunpack.c.l.b16 %v995
        %v1035 = vunpack.c.l.b16 %v996
        %v1036 = vunpack.c.l.b16 %v997
        %v1037 = vunpack.c.l.b16 %v998
        %v1038 = vunpack.c.l.b16 %v999
        %v1039 = vunpack.c.l.b16 %v1000
        %v1040 = vunpack.c.l.b16 %v1001
        %v1041 = vunpack.c.l.b16 %v1002
        %v1042 = vunpack.c.l.b16 %v1003
        %v1043 = vunpack.c.l.b16 %v1004
        %v1044 = vunpack.c.l.b16 %v1005
        %v1045 = vunpack.c.l.b16 %v1006
        %v1046 = vpack.c.b16 %v1031, %v1030
        %v1047 = vpack.c.b16 %v1033, %v1032
        %v1048 = vpack.c.b16 %v1035, %v1034
        %v1049 = vpack.c.b16 %v1037, %v1036
        %v1050 = vpack.c.b16 %v1039, %v1038
        %v1051 = vpack.c.b16 %v1041, %v1040
        %v1052 = vpack.c.b16 %v1043, %v1042
        %v1053 = vpack.c.b16 %v1045, %v1044
        %1062 = vmatprep.subr.bf16.mxu0 0
        %1063 = vmatpush1.bf16.msra.mxu0 %v1046
        %1064 = vmatprep.subr.bf16.mxu0 0
        %1065 = vmatpush1.bf16.msra.mxu0 %v1047
        %1066 = vmatprep.subr.bf16.mxu0 0
        %1067 = vmatpush1.bf16.msra.mxu0 %v1048
        %1068 = vmatprep.subr.bf16.mxu0 0
        %1069 = vmatpush1.bf16.msra.mxu0 %v1049
        %1070 = vmatprep.subr.bf16.mxu0 0
        %1071 = vmatpush1.bf16.msra.mxu0 %v1050
        %1072 = vmatprep.subr.bf16.mxu0 0
        %1073 = vmatpush1.bf16.msra.mxu0 %v1051
        %1074 = vmatprep.subr.bf16.mxu0 0
        %1075 = vmatpush1.bf16.msra.mxu0 %v1052
        %1076 = vmatprep.subr.bf16.mxu0 0
        %1077 = vmatpush1.bf16.msra.mxu0 %v1053
        %1078 = vmatprep.subr.bf16.mxu0 0
        %1079 = vmatpush1.bf16.msra.mxu0 0
        %1080 = vmatprep.subr.bf16.mxu0 0
        %1081 = vmatpush1.bf16.msra.mxu0 0
        %1082 = vmatprep.subr.bf16.mxu0 0
        %1083 = vmatpush1.bf16.msra.mxu0 0
        %1084 = vmatprep.subr.bf16.mxu0 0
        %1085 = vmatpush1.bf16.msra.mxu0 0
        %1086 = vmatprep.subr.bf16.mxu0 0
        %1087 = vmatpush1.bf16.msra.mxu0 0
        %1088 = vmatprep.subr.bf16.mxu0 0
        %1089 = vmatpush1.bf16.msra.mxu0 0
        %1090 = vmatprep.subr.bf16.mxu0 0
        %1091 = vmatpush1.bf16.msra.mxu0 0
        %1092 = vmatprep.subr.bf16.mxu0 0
        %1093 = vmatpush1.bf16.msra.mxu0 0
        %1094 = vmatprep.mubr.bf16.mxu0 0
        %1095 = vmatmul.mubr.bf16.gmra.mrb[0].mxu0 %v987
        %v1096 = vpop.f32.mrb[0].mxu0
        %v1097 = vadd.f32 %v1012, %v1096
        %v1098 = vpop.f32.mrb[0].mxu0
        %v1099 = vpop.f32.mrb[0].mxu0
        %v1100 = vadd.f32 %v1012, %v1099
        %v1101 = vpop.f32.mrb[0].mxu0
        %1102 = vmatprep.mubr.bf16.mxu0 0
        %1103 = vmatmul.mubr.bf16.gmra.mrb[0].mxu0 %v988
        %v1104 = vpop.f32.mrb[0].mxu0
        %v1105 = vadd.f32 %v1012, %v1104
        %v1106 = vpop.f32.mrb[0].mxu0
        %v1107 = vpop.f32.mrb[0].mxu0
        %v1108 = vadd.f32 %v1012, %v1107
        %v1109 = vpop.f32.mrb[0].mxu0
        %1110 = vmatprep.mubr.bf16.mxu0 0
        %1111 = vmatmul.mubr.bf16.gmra.mrb[0].mxu0 %v989
        %v1112 = vpop.f32.mrb[0].mxu0
        %v1113 = vadd.f32 %v1012, %v1112
        %v1114 = vpop.f32.mrb[0].mxu0
        %v1115 = vpop.f32.mrb[0].mxu0
        %v1116 = vadd.f32 %v1012, %v1115
        %v1117 = vpop.f32.mrb[0].mxu0
        %1118 = vmatprep.mubr.bf16.mxu0 0
        %1119 = vmatmul.mubr.bf16.gmra.mrb[0].mxu0 %v990
        %v1120 = vpop.f32.mrb[0].mxu0
        %v1121 = vadd.f32 %v1012, %v1120
        %v1122 = vpop.f32.mrb[0].mxu0
        %v1123 = vpop.f32.mrb[0].mxu0
        %v1124 = vadd.f32 %v1012, %v1123
        %v1125 = vpop.f32.mrb[0].mxu0
        %1126 = vdwg.mxu0
        %1127 = vst [vmem:[%s245] sm:$0xff] %v1097
        %1128 = vst [vmem:[%s245 + $0x8] sm:$0xff] %v1100
        %1129 = vst [vmem:[%s245 + $0x10] sm:$0xff] %v1105
        %1130 = vst [vmem:[%s245 + $0x18] sm:$0xff] %v1108
        %1131 = vst [vmem:[%s245 + $0x20] sm:$0xff] %v1113
        %1132 = vst [vmem:[%s245 + $0x28] sm:$0xff] %v1116
        %1133 = vst [vmem:[%s245 + $0x30] sm:$0xff] %v1121
        %1134 = vst [vmem:[%s245 + $0x38] sm:$0xff] %v1124
        %s1135 = sand.u32 %s159, 1
        %s1136 = scalar_lea.sflag [#allocation3], %s1135
        %s1137 = sand.u32 %s159, 1
        %s1138 = smul.addr %s1137, 64
        %s1139 = scalar_lea.vmem [#allocation2], %s1138
        // Predicated region
        $region45: #{channel_attention.1} parent=43 // pred_check
          %p1140 = pneg %p169
        $region46: #{channel_attention.1} parent=43 // pred_check_branch
          %1142 = sbr.rel (%p1140) target = $region48
        $region47: #{channel_attention.1} parent=43 // pred_region
          %s1143 = smul.u32 8, %s20
          %s1145 = ssub.s32 1024, 1024
          %1146 = vsyncadd %s1136, %s1145
          %s1147 = smul.addr %s1143, 128
          %s1148 = scalar_lea.hbm %s6, %s1147
          %s1149 = sshll.u32 %s1139, 4
          %s1150 = int_to_ptr.vmem [resolvable:$true] %s1149
          %1155 = dma.vmem_to_hbm [thread:$0]  %s1150, 1024, %s1148, %s1136, 128, 128, 8
        $region48: #{channel_attention.1} parent=43 // pred_fallthru
          _
      $region44: #{channel_attention.1} parent=5 // pred_fallthru
        _
      %p1156 = scmp.le.s32.totalorder 2, %s15
      // Predicated region
      $region49: #{channel_attention.1} parent=5 // pred_check
        %p1157 = pneg %p1156
      $region50: #{channel_attention.1} parent=5 // pred_check_branch
        %1159 = sbr.rel (%p1157) target = $region52
      $region51: #{channel_attention.1} parent=5 // pred_region
        %s1160 = ssub.s32 %s15, 2
        // Predicated region
        $region53: #{channel_attention.1} parent=51 // pred_check
          %p1161 = pneg %p175
        $region54: #{channel_attention.1} parent=51 // pred_check_branch
          %1163 = sbr.rel (%p1161) target = $region56
        $region55: #{channel_attention.1} parent=51 // pred_region
          %s1164 = sand.u32 %s160, 1
          %s1165 = scalar_lea.sflag [#allocation3], %s1164
          %s1166 = sand.u32 %s160, 1
          %s1167 = smul.addr %s1166, 64
          %s1168 = scalar_lea.vmem [#allocation2], %s1167
          %1169 = dma.done %s1165, 1024
        $region56: #{channel_attention.1} parent=51 // pred_fallthru
          _
      $region52: #{channel_attention.1} parent=5 // pred_fallthru
        _
    $region6: #{channel_attention.1} parent=1 // loop_footer
      %s19 = sadd.s32 1, %s15
    $region7: #{channel_attention.1} parent=1 // loop_footer_branch
      %14 = sbr.rel target = $region3
    $region8: #{channel_attention.1} parent=1 // loop_exit
      _
    %1170 = vsyncpa [#allocation3], 1
    %s1171 = scalar_lea.sflag [#allocation3], 1
    %1172 = vsyncpa %s1171, 1

</llo_original>
